<compile_context>
chip_gen: v7x
topology: tpu7x:2x2x1
jax: 0.10.0
libtpu: 0.0.40
codegen_flags: <defaults>
</compile_context>

<pallas_src>
import functools
import math

import jax
import jax.numpy as jnp
from jax.experimental import pallas as pl
from jax.experimental.pallas import tpu as pltpu

_LANES = 128          # vreg lane width
_SUBLANES = 8         # f32 vreg sublane count
_MAX_ROW_TILE = 2048  # (2048, 128) f32 = 1 MiB per output block


def _logdet_fill_kernel(logdet_ref):
    """Identity bijection: log|det J| = 0 for every batch element."""
    # Full-vreg, unmasked stores of the constant log-determinant.
    logdet_ref[...] = jnp.zeros_like(logdet_ref)


@functools.partial(jax.jit, static_argnames=("event_shape",))
def bijection_forward(x, event_shape):
    """Forward bijection map (identity).

    x: array with shape (*batch_shape, *event_shape)
    returns (z, log_det) with z.shape == x.shape, log_det.shape == batch_shape.
    log_det is float32 regardless of x dtype.
    """
    event_ndim = len(event_shape)
    batch_shape = x.shape[: x.ndim - event_ndim]

    b = math.prod(batch_shape) if batch_shape else 1

    # z is identically x: return it directly (free aliasing through jit,
    # zero HBM traffic) instead of copying it through the kernel.
    z = x

    if b == 0:
        # Empty batch: nothing for the kernel to write.
        return z, jnp.zeros(batch_shape, dtype=jnp.float32)

    # Sublane/lane-dense layout for log_det: (rows, 128) f32, rows padded to a
    # multiple of the row tile (a multiple of 8) so every block is a dense,
    # unmasked full-vreg store with no ragged tail.
    rows = pl.cdiv(b, _LANES)
    rows_padded = pl.cdiv(rows, _SUBLANES) * _SUBLANES
    if rows_padded <= _MAX_ROW_TILE:
        row_tile = rows_padded
    else:
        row_tile = _MAX_ROW_TILE
        rows_padded = pl.cdiv(rows_padded, row_tile) * row_tile
    num_tiles = rows_padded // row_tile

    logdet_padded = pl.pallas_call(
        _logdet_fill_kernel,
        grid=(num_tiles,),
        in_specs=[],                                       # kernel takes no inputs
        out_specs=pl.BlockSpec((row_tile, _LANES), lambda i: (i, 0)),
        out_shape=jax.ShapeDtypeStruct((rows_padded, _LANES), jnp.float32),
        compiler_params=pltpu.CompilerParams(
            dimension_semantics=("parallel",),             # no-op for 1 step; shards TCs if many
        ),
        cost_estimate=pl.CostEstimate(
            flops=0,
            transcendentals=0,
            bytes_accessed=rows_padded * _LANES * 4,       # only the log_det write
        ),
    )()

    log_det = logdet_padded.reshape(-1)[:b].reshape(batch_shape)
    return z, log_det


if __name__ == "__main__":
    key = jax.random.PRNGKey(0)
    batch = 2
    event_shape = (4, 16, 16)  # channels=4, spatial=16x16 (NCHW-style event)
    x = jax.random.normal(key, (batch, *event_shape), dtype=jnp.float32)

    z, log_det = bijection_forward(x, event_shape)
    jax.block_until_ready((z, log_det))

    assert z.shape == x.shape, (z.shape, x.shape)
    assert log_det.shape == (batch,), log_det.shape
    assert jnp.allclose(z, x)
    assert jnp.allclose(log_det, jnp.zeros((batch,), jnp.float32))

    print("KERNEL_OK")
</pallas_src>

<mosaic_0001>
module attributes {stable_mosaic.version = 11 : i64} {
  func.func @_logdet_fill_kernel(%arg0: i32, %arg1: memref<8x128xf32, #tpu.memory_space<vmem>>) attributes {dimension_semantics = [#tpu.dimension_semantics<parallel>], iteration_bounds = array<i64: 1>, scalar_prefetch = 0 : i64, scratch_operands = 0 : i64, tpu.core_type = #tpu.core_type<tc>, window_params = [{transform_indices = @transform_0, window_bounds = array<i64: 8, 128>}]} {
    %cst = arith.constant 0.000000e+00 : f32
    %0 = vector.broadcast %cst : f32 to vector<8x128xf32>
    %c0 = arith.constant 0 : index
    %c0_0 = arith.constant 0 : index
    %1 = vector.load %arg1[%c0, %c0_0] : memref<8x128xf32, #tpu.memory_space<vmem>>, vector<8x128xf32>
    tpu.vector_store %arg1[%c0, %c0_0], %0 {strides = array<i32>} : memref<8x128xf32, #tpu.memory_space<vmem>>, vector<8x128xf32>,
    return
  }
  func.func @transform_0(%arg0: i32) -> (i32, i32) {
    %c0_i32 = arith.constant 0 : i32
    %c0_i32_0 = arith.constant 0 : i32
    return %arg0, %c0_i32 : i32, i32
  }
}

</mosaic_0001>

<llo_original>
// kernel: bijection_forward.1
$region0: #{bijection_forward.1}
  #allocation0 [shape = 'u32[]', space=smem, size = 0x4, offset = 0x4, fixed_abs, tag = 'smem constant byte address 0x4 - core index']
  #allocation1 [shape = 'u32[144,128]{1,0:T(1,128)}', space=vmem, size = 0x12000, scoped, tag = 'internal scratch']
  %s0 = inlined_call_operand.vmem [shape: f32[8,128], index: 0, kind: output, shape index: {}]
  %s1 = sld [smem:[#allocation0]]
  $region10: #{bijection_forward.1} parent=0
    _
  %s3 = ssub.s32 1, %s1
  %s4 = scalar_select 0, %s3, %s1
  %5 = vst [vmem:[%s0] sm:$0xff] 0.0
  // Predicated region
  $region2: #{bijection_forward.1} parent=0 // pred_check
    _
  $region3: #{bijection_forward.1} parent=0 // pred_check_branch
    %7 = sbr.rel (0) target = $region5
  $region4: #{bijection_forward.1} parent=0 // pred_region
    _
  $region5: #{bijection_forward.1} parent=0 // pred_fallthru
    _
  // Predicated region
  $region6: #{bijection_forward.1} parent=0 // pred_check
    _
  $region7: #{bijection_forward.1} parent=0 // pred_check_branch
    %9 = sbr.rel (0) target = $region9
  $region8: #{bijection_forward.1} parent=0 // pred_region
    _
  $region9: #{bijection_forward.1} parent=0 // pred_fallthru
    _

</llo_original>
